<compile_context>
chip_gen: v6e
topology: v6e:2x2x1
jax: 0.10.0
libtpu: 0.0.40
codegen_flags: <defaults>
</compile_context>

<pallas_src>
import functools

import jax
import jax.numpy as jnp
from jax.experimental import pallas as pl
from jax.experimental.pallas import tpu as pltpu


def _round_up(x, m):
    return (x + m - 1) // m * m


def _cdiv(a, b):
    return (a + b - 1) // b


def _readout_kernel(*refs, use_tanh, have_graph):
    if have_graph:
        (gid_ref, xin_ref, xout_ref,
         wg_in_ref, wg_out_ref, bg_ref, wt_ref, bt_ref,
         nodewise_ref, graph_ref) = refs
    else:
        (xin_ref, xout_ref,
         wg_in_ref, wg_out_ref, bg_ref, wt_ref, bt_ref,
         nodewise_ref) = refs

    xin = xin_ref[...]          # (tile_n, H) bf16
    xout = xout_ref[...]        # (tile_n, H) bf16

    # gating = sigmoid([x_in, x_out] @ Wg + bg); concat folded into two matmuls.
    gate_logits = (
        jnp.dot(xin, wg_in_ref[...], preferred_element_type=jnp.float32)
        + jnp.dot(xout, wg_out_ref[...], preferred_element_type=jnp.float32)
        + bg_ref[...])
    gating = jax.nn.sigmoid(gate_logits)                           # (tile_n, Cp) f32

    transform = (jnp.dot(xout, wt_ref[...], preferred_element_type=jnp.float32)
                 + bt_ref[...])
    if use_tanh:
        transform = jnp.tanh(transform)

    nodewise = gating * transform                                  # (tile_n, Cp) f32

    # Store only the real classes (C may be < 128): lane-masked store, but far
    # less HBM writeback than a zero-padded f32 (tile_n, 128) block.
    num_classes = nodewise_ref.shape[1]
    nodewise_ref[...] = nodewise[:, :num_classes]

    if have_graph:
        step = pl.program_id(1)

        @pl.when(step == 0)
        def _():
            graph_ref[...] = jnp.zeros_like(graph_ref)

        # Segment-sum (torch index_add_) via one-hot matmul on the MXU with the
        # canonical (Gp, tile_n) x (tile_n, Cp) contraction; gid is lane-dense.
        tile_n = gid_ref.shape[1]
        n_graphs = graph_ref.shape[0]
        gid = gid_ref[...]                                         # (1, tile_n) int32
        giota = jax.lax.broadcasted_iota(jnp.int32, (n_graphs, tile_n), 0)
        onehot = (giota == gid).astype(jnp.float32)                # (Gp, tile_n); pad cols -> 0
        graph_ref[...] += jax.lax.dot_general(
            onehot, nodewise,
            dimension_numbers=(((1,), (0,)), ((), ())),
            preferred_element_type=jnp.float32)                    # (Gp, Cp)


@functools.partial(
    jax.jit,
    static_argnames=("num_graphs", "use_tanh_readout", "tile_n", "num_cores"))
def readout_forward(raw_node_in, raw_node_out, params,
                    graph_nodes_list=None, num_graphs=None,
                    use_tanh_readout=False, tile_n=1024, num_cores=1):
    """Fused forward pass of Readout (eval mode). Returns (nodewise, graph or None).

    tile_n     : primary tuning knob (node rows per grid step), multiple of 128.
    num_cores  : set to 2 on v7x to shard the node axis across both TensorCores
                 (per-core partial graph accumulators are reduced here).
    """
    N, H = raw_node_out.shape
    C = params["wt"].shape[1]
    Cp = _round_up(C, 128)          # lane-dense compute/weight output dim

    have_graph = graph_nodes_list is not None
    if have_graph:
        assert num_graphs is not None, "graph labels require num_graphs"

    # Node tiling: large tiles amortize the ~0.35us/step pipeline overhead.
    # tile_n is kept a multiple of 128 so the (1, tile_n) gid block is lane-legal.
    per_core = _cdiv(N, num_cores)
    tile_n = max(128, min(_round_up(tile_n, 128), _round_up(per_core, 128)))
    steps = max(1, _cdiv(per_core, tile_n))
    Np = num_cores * steps * tile_n

    if have_graph:
        Gp = max(_round_up(num_graphs, 8), 8)
        gid = graph_nodes_list.astype(jnp.int32).reshape(1, N)
        # padded nodes get an out-of-range id -> their one-hot column is all zero.
        gid = jnp.pad(gid, ((0, 0), (0, Np - N)), constant_values=Gp)

    # Row-pad activations and cast to bf16 (MXU accumulates in f32).  The feature
    # dim H is NOT padded to 128: for small H (e.g. 32) that would inflate the
    # input HBM reads 4x and the MXU has plenty of slack in this kernel.
    def pad_x(x):
        return jnp.pad(x, ((0, Np - N), (0, 0))).astype(jnp.bfloat16)

    xin = pad_x(raw_node_in)
    xout = pad_x(raw_node_out)

    wg = params["wg"]               # (2H, C), pre-transposed so the kernel does x @ W
    padw = lambda w: jnp.pad(w, ((0, 0), (0, Cp - C))).astype(jnp.bfloat16)
    wg_in, wg_out = padw(wg[:H]), padw(wg[H:])
    wt = padw(params["wt"])
    padb = lambda b: jnp.pad(b.reshape(1, C), ((0, 0), (0, Cp - C))).astype(jnp.float32)
    bg, bt = padb(params["bg"]), padb(params["bt"])

    row_map = lambda c, i: (c * steps + i, 0)
    row_x = pl.BlockSpec((tile_n, H), row_map)
    const = lambda shape: pl.BlockSpec(shape, lambda c, i: (0, 0))
    # TODO(synk): pipeline_mode=pl.Buffered(1) on the constant weight/bias specs
    # would trim their double-buffered VMEM footprint for large H/C configs.

    in_specs = [
        row_x,                       # raw_node_in  (Np, H)
        row_x,                       # raw_node_out (Np, H)
        const((H, Cp)),              # gate W (node_in half)
        const((H, Cp)),              # gate W (node_out half)
        const((1, Cp)),              # gate bias
        const((H, Cp)),              # transform W
        const((1, Cp)),              # transform bias
    ]
    args = [xin, xout, wg_in, wg_out, bg, wt, bt]
    nodewise_spec = pl.BlockSpec((tile_n, C), row_map)   # unpadded last dim == C

    if have_graph:
        in_specs = [pl.BlockSpec((1, tile_n),
                                 lambda c, i: (0, c * steps + i))] + in_specs
        args = [gid] + args
        out_shape = (jax.ShapeDtypeStruct((Np, C), jnp.float32),
                     jax.ShapeDtypeStruct((num_cores, Gp, Cp), jnp.float32))
        out_specs = (nodewise_spec,
                     pl.BlockSpec((None, Gp, Cp), lambda c, i: (c, 0, 0)))
    else:
        out_shape = (jax.ShapeDtypeStruct((Np, C), jnp.float32),)
        out_specs = (nodewise_spec,)

    outs = pl.pallas_call(
        functools.partial(_readout_kernel, use_tanh=use_tanh_readout,
                          have_graph=have_graph),
        out_shape=out_shape,
        grid_spec=pltpu.PrefetchScalarGridSpec(
            num_scalar_prefetch=0,
            grid=(num_cores, steps),
            in_specs=in_specs,
            out_specs=out_specs,
        ),
        compiler_params=pltpu.CompilerParams(
            # core axis is parallel (v7x megacore); node axis must be sequential
            # when the per-core graph accumulator stays resident in VMEM.
            dimension_semantics=("parallel",
                                 "arbitrary" if have_graph else "parallel"),
            vmem_limit_bytes=32 * 1024 * 1024),
    )(*args)

    if have_graph:
        nodewise_p, graph_p = outs
        graph = graph_p.sum(axis=0)[:num_graphs, :C]
        if use_tanh_readout:
            graph = jnp.tanh(graph)
    else:
        nodewise_p, = outs
        graph = None

    # Crop padded node rows (their values are sigmoid(bg)*bt garbage by design).
    return nodewise_p[:N], graph


# ----------------------------------------------------------------------------
# Reference, init, and self-test.
# ----------------------------------------------------------------------------

def _reference(xin, xout, params, gid, num_graphs, use_tanh):
    # mirror the kernel's bf16 cast of activations / weights (accumulation in f32)
    bf = lambda a: a.astype(jnp.bfloat16).astype(jnp.float32)
    xin, xout = bf(xin), bf(xout)
    wg, wt = bf(params["wg"]), bf(params["wt"])
    gate_in = jnp.concatenate([xin, xout], axis=-1)
    gating = jax.nn.sigmoid(gate_in @ wg + params["bg"])
    t = xout @ wt + params["bt"]
    if use_tanh:
        t = jnp.tanh(t)
    nodewise = gating * t
    graph = None
    if gid is not None:
        graph = jax.ops.segment_sum(nodewise, gid, num_segments=num_graphs)
        if use_tanh:
            graph = jnp.tanh(graph)
    return nodewise, graph


def init_params(key, hidden_size, num_classes):
    """Xavier-uniform weights (gain=1), zero biases, stored pre-transposed (x @ W)."""
    kg, kt = jax.random.split(key)

    def xavier(k, fan_in, fan_out):
        bound = (6.0 / (fan_in + fan_out)) ** 0.5
        return jax.random.uniform(k, (fan_in, fan_out), jnp.float32, -bound, bound)

    return {
        "wg": xavier(kg, 2 * hidden_size, num_classes),    # regression_gate
        "bg": jnp.zeros((num_classes,), jnp.float32),
        "wt": xavier(kt, hidden_size, num_classes),        # regression_transform
        "bt": jnp.zeros((num_classes,), jnp.float32),
    }


if __name__ == "__main__":
    N, HIDDEN, CLASSES, GRAPHS = 24, 32, 10, 3   # config.hidden_size=32, num_classes=10

    key = jax.random.PRNGKey(0)
    k_in, k_out, k_gid, k_p = jax.random.split(key, 4)
    raw_node_in = jax.random.normal(k_in, (N, HIDDEN), jnp.float32)
    raw_node_out = jax.random.normal(k_out, (N, HIDDEN), jnp.float32)
    graph_nodes_list = jax.random.randint(k_gid, (N,), 0, GRAPHS, jnp.int32)
    params = init_params(k_p, HIDDEN, CLASSES)

    # 1) graph labels, no tanh readout
    nodewise, graph = readout_forward(
        raw_node_in, raw_node_out, params,
        graph_nodes_list=graph_nodes_list, num_graphs=GRAPHS,
        use_tanh_readout=False)
    jax.block_until_ready((nodewise, graph))
    ref_nw, ref_g = _reference(raw_node_in, raw_node_out, params,
                               graph_nodes_list, GRAPHS, False)
    assert nodewise.shape == (N, CLASSES)
    assert graph.shape == (GRAPHS, CLASSES)
    assert jnp.allclose(nodewise, ref_nw, atol=2e-3, rtol=2e-3)
    assert jnp.allclose(graph, ref_g, atol=2e-3, rtol=2e-3)

    # 2) graph labels + tanh readout
    nodewise_t, graph_t = readout_forward(
        raw_node_in, raw_node_out, params,
        graph_nodes_list=graph_nodes_list, num_graphs=GRAPHS,
        use_tanh_readout=True)
    jax.block_until_ready((nodewise_t, graph_t))
    ref_nw_t, ref_g_t = _reference(raw_node_in, raw_node_out, params,
                                   graph_nodes_list, GRAPHS, True)
    assert jnp.allclose(nodewise_t, ref_nw_t, atol=2e-3, rtol=2e-3)
    assert jnp.allclose(graph_t, ref_g_t, atol=2e-3, rtol=2e-3)

    # 3) no graph labels (graph branch statically compiled out)
    nodewise_ng, graph_ng = readout_forward(raw_node_in, raw_node_out, params)
    jax.block_until_ready(nodewise_ng)
    assert graph_ng is None
    assert jnp.allclose(nodewise_ng, ref_nw, atol=2e-3, rtol=2e-3)

    print("KERNEL_OK")
</pallas_src>

<mosaic_0001>
module attributes {stable_mosaic.version = 11 : i64} {
  func.func @_readout_kernel(%arg0: i32, %arg1: i32, %arg2: memref<1x128xi32, #tpu.memory_space<vmem>>, %arg3: memref<128x32xbf16, #tpu.memory_space<vmem>>, %arg4: memref<128x32xbf16, #tpu.memory_space<vmem>>, %arg5: memref<32x128xbf16, #tpu.memory_space<vmem>>, %arg6: memref<32x128xbf16, #tpu.memory_space<vmem>>, %arg7: memref<1x128xf32, #tpu.memory_space<vmem>>, %arg8: memref<32x128xbf16, #tpu.memory_space<vmem>>, %arg9: memref<1x128xf32, #tpu.memory_space<vmem>>, %arg10: memref<128x10xf32, #tpu.memory_space<vmem>>, %arg11: memref<1x8x128xf32, #tpu.memory_space<vmem>>) attributes {dimension_semantics = [#tpu.dimension_semantics<parallel>, #tpu.dimension_semantics<arbitrary>], iteration_bounds = array<i64: 1, 1>, scalar_prefetch = 0 : i64, scratch_operands = 0 : i64, tpu.core_type = #tpu.core_type<tc>, window_params = [{transform_indices = @transform_0, window_bounds = array<i64: 1, 128>}, {transform_indices = @transform_1, window_bounds = array<i64: 128, 32>}, {transform_indices = @transform_2, window_bounds = array<i64: 128, 32>}, {pipeline_mode = #tpu.pipeline_mode<synchronous>, transform_indices = @transform_3, window_bounds = array<i64: 32, 128>}, {pipeline_mode = #tpu.pipeline_mode<synchronous>, transform_indices = @transform_4, window_bounds = array<i64: 32, 128>}, {pipeline_mode = #tpu.pipeline_mode<synchronous>, transform_indices = @transform_5, window_bounds = array<i64: 1, 128>}, {pipeline_mode = #tpu.pipeline_mode<synchronous>, transform_indices = @transform_6, window_bounds = array<i64: 32, 128>}, {pipeline_mode = #tpu.pipeline_mode<synchronous>, transform_indices = @transform_7, window_bounds = array<i64: 1, 128>}, {transform_indices = @transform_8, window_bounds = array<i64: 128, 10>}, {transform_indices = @transform_9, window_bounds = array<i64: 1, 8, 128>}]} {
    %c0 = arith.constant 0 : index
    %c0_0 = arith.constant 0 : index
    %0 = vector.load %arg3[%c0, %c0_0] : memref<128x32xbf16, #tpu.memory_space<vmem>>, vector<128x32xbf16>
    %c0_1 = arith.constant 0 : index
    %c0_2 = arith.constant 0 : index
    %1 = vector.load %arg4[%c0_1, %c0_2] : memref<128x32xbf16, #tpu.memory_space<vmem>>, vector<128x32xbf16>
    %c0_3 = arith.constant 0 : index
    %c0_4 = arith.constant 0 : index
    %2 = vector.load %arg5[%c0_3, %c0_4] : memref<32x128xbf16, #tpu.memory_space<vmem>>, vector<32x128xbf16>
    %cst = arith.constant dense<0.000000e+00> : vector<128x128xf32>
    %3 = tpu.matmul %0, %2, %cst {dimension_numbers = #tpu.dot_dimension_numbers<[1], [0], [0], [1], [0, 0, 1, 1], [], []>} : vector<128x32xbf16>, vector<32x128xbf16>, vector<128x128xf32> -> vector<128x128xf32>
    %c0_5 = arith.constant 0 : index
    %c0_6 = arith.constant 0 : index
    %4 = vector.load %arg6[%c0_5, %c0_6] : memref<32x128xbf16, #tpu.memory_space<vmem>>, vector<32x128xbf16>
    %cst_7 = arith.constant dense<0.000000e+00> : vector<128x128xf32>
    %5 = tpu.matmul %1, %4, %cst_7 {dimension_numbers = #tpu.dot_dimension_numbers<[1], [0], [0], [1], [0, 0, 1, 1], [], []>} : vector<128x32xbf16>, vector<32x128xbf16>, vector<128x128xf32> -> vector<128x128xf32>
    %6 = arith.addf %3, %5 : vector<128x128xf32>
    %c0_8 = arith.constant 0 : index
    %c0_9 = arith.constant 0 : index
    %7 = vector.load %arg7[%c0_8, %c0_9] : memref<1x128xf32, #tpu.memory_space<vmem>>, vector<1x128xf32>
    %8 = vector.broadcast %7 : vector<1x128xf32> to vector<128x128xf32>
    %9 = arith.addf %6, %8 : vector<128x128xf32>
    %10 = arith.negf %9 : vector<128x128xf32>
    %11 = math.exp %10 : vector<128x128xf32>
    %cst_10 = arith.constant 1.000000e+00 : f32
    %12 = vector.broadcast %cst_10 : f32 to vector<128x128xf32>
    %13 = arith.addf %12, %11 : vector<128x128xf32>
    %14 = arith.divf %12, %13 : vector<128x128xf32>
    %c0_11 = arith.constant 0 : index
    %c0_12 = arith.constant 0 : index
    %15 = vector.load %arg8[%c0_11, %c0_12] : memref<32x128xbf16, #tpu.memory_space<vmem>>, vector<32x128xbf16>
    %cst_13 = arith.constant dense<0.000000e+00> : vector<128x128xf32>
    %16 = tpu.matmul %1, %15, %cst_13 {dimension_numbers = #tpu.dot_dimension_numbers<[1], [0], [0], [1], [0, 0, 1, 1], [], []>} : vector<128x32xbf16>, vector<32x128xbf16>, vector<128x128xf32> -> vector<128x128xf32>
    %c0_14 = arith.constant 0 : index
    %c0_15 = arith.constant 0 : index
    %17 = vector.load %arg9[%c0_14, %c0_15] : memref<1x128xf32, #tpu.memory_space<vmem>>, vector<1x128xf32>
    %18 = vector.broadcast %17 : vector<1x128xf32> to vector<128x128xf32>
    %19 = arith.addf %16, %18 : vector<128x128xf32>
    %20 = arith.mulf %14, %19 : vector<128x128xf32>
    %21 = vector.extract_strided_slice %20 {offsets = [0, 0], sizes = [128, 10], strides = [1, 1]} : vector<128x128xf32> to vector<128x10xf32>
    %c0_16 = arith.constant 0 : index
    %c0_17 = arith.constant 0 : index
    %22 = vector.load %arg10[%c0_16, %c0_17] : memref<128x10xf32, #tpu.memory_space<vmem>>, vector<128x10xf32>
    tpu.vector_store %arg10[%c0_16, %c0_17], %21 {strides = array<i32>} : memref<128x10xf32, #tpu.memory_space<vmem>>, vector<128x10xf32>,
    %c0_i32 = arith.constant 0 : i32
    %23 = arith.cmpi eq, %arg1, %c0_i32 : i32
    %24 = arith.extui %23 : i1 to i32
    %c0_i32_18 = arith.constant 0 : i32
    %25 = arith.cmpi ne, %24, %c0_i32_18 : i32
    scf.if %25 {
      %cst_28 = arith.constant 0.000000e+00 : f32
      %39 = vector.broadcast %cst_28 : f32 to vector<8x128xf32>
      %c0_29 = arith.constant 0 : index
      %c0_30 = arith.constant 0 : index
      %c0_31 = arith.constant 0 : index
      %40 = vector.load %arg11[%c0_29, %c0_30, %c0_31] : memref<1x8x128xf32, #tpu.memory_space<vmem>>, vector<1x8x128xf32>
      %41 = vector.shape_cast %40 : vector<1x8x128xf32> to vector<8x128xf32>
      %42 = vector.shape_cast %39 : vector<8x128xf32> to vector<1x8x128xf32>
      tpu.vector_store %arg11[%c0_29, %c0_30, %c0_31], %42 {strides = array<i32>} : memref<1x8x128xf32, #tpu.memory_space<vmem>>, vector<1x8x128xf32>,
    } else {
    }
    %c0_19 = arith.constant 0 : index
    %c0_20 = arith.constant 0 : index
    %26 = vector.load %arg2[%c0_19, %c0_20] : memref<1x128xi32, #tpu.memory_space<vmem>>, vector<1x128xi32>
    %27 = tpu.iota {dimensions = array<i32: 0>} : vector<8x128xi32>
    %28 = vector.broadcast %26 : vector<1x128xi32> to vector<8x128xi32>
    %29 = arith.cmpi eq, %27, %28 : vector<8x128xi32>
    %30 = arith.extui %29 : vector<8x128xi1> to vector<8x128xi32>
    %31 = arith.sitofp %30 : vector<8x128xi32> to vector<8x128xf32>
    %c0_21 = arith.constant 0 : index
    %c0_22 = arith.constant 0 : index
    %c0_23 = arith.constant 0 : index
    %32 = vector.load %arg11[%c0_21, %c0_22, %c0_23] : memref<1x8x128xf32, #tpu.memory_space<vmem>>, vector<1x8x128xf32>
    %33 = vector.shape_cast %32 : vector<1x8x128xf32> to vector<8x128xf32>
    %cst_24 = arith.constant dense<0.000000e+00> : vector<8x128xf32>
    %34 = tpu.matmul %31, %20, %cst_24 {dimension_numbers = #tpu.dot_dimension_numbers<[1], [0], [0], [1], [0, 0, 1, 1], [], []>} : vector<8x128xf32>, vector<128x128xf32>, vector<8x128xf32> -> vector<8x128xf32>
    %35 = arith.addf %33, %34 : vector<8x128xf32>
    %c0_25 = arith.constant 0 : index
    %c0_26 = arith.constant 0 : index
    %c0_27 = arith.constant 0 : index
    %36 = vector.load %arg11[%c0_25, %c0_26, %c0_27] : memref<1x8x128xf32, #tpu.memory_space<vmem>>, vector<1x8x128xf32>
    %37 = vector.shape_cast %36 : vector<1x8x128xf32> to vector<8x128xf32>
    %38 = vector.shape_cast %35 : vector<8x128xf32> to vector<1x8x128xf32>
    tpu.vector_store %arg11[%c0_25, %c0_26, %c0_27], %38 {strides = array<i32>} : memref<1x8x128xf32, #tpu.memory_space<vmem>>, vector<1x8x128xf32>,
    return
  }
  func.func @transform_0(%arg0: i32, %arg1: i32) -> (i32, i32) {
    %c1_i32 = arith.constant 1 : i32
    %0 = arith.muli %arg0, %c1_i32 : i32
    %1 = arith.addi %0, %arg1 : i32
    %c0_i32 = arith.constant 0 : i32
    %c0_i32_0 = arith.constant 0 : i32
    return %c0_i32, %1 : i32, i32
  }
  func.func @transform_1(%arg0: i32, %arg1: i32) -> (i32, i32) {
    %c1_i32 = arith.constant 1 : i32
    %0 = arith.muli %arg0, %c1_i32 : i32
    %1 = arith.addi %0, %arg1 : i32
    %c0_i32 = arith.constant 0 : i32
    %c0_i32_0 = arith.constant 0 : i32
    return %1, %c0_i32 : i32, i32
  }
  func.func @transform_2(%arg0: i32, %arg1: i32) -> (i32, i32) {
    %c1_i32 = arith.constant 1 : i32
    %0 = arith.muli %arg0, %c1_i32 : i32
    %1 = arith.addi %0, %arg1 : i32
    %c0_i32 = arith.constant 0 : i32
    %c0_i32_0 = arith.constant 0 : i32
    return %1, %c0_i32 : i32, i32
  }
  func.func @transform_3(%arg0: i32, %arg1: i32) -> (i32, i32) {
    %c0_i32 = arith.constant 0 : i32
    %c0_i32_0 = arith.constant 0 : i32
    %c0_i32_1 = arith.constant 0 : i32
    return %c0_i32, %c0_i32_0 : i32, i32
  }
  func.func @transform_4(%arg0: i32, %arg1: i32) -> (i32, i32) {
    %c0_i32 = arith.constant 0 : i32
    %c0_i32_0 = arith.constant 0 : i32
    %c0_i32_1 = arith.constant 0 : i32
    return %c0_i32, %c0_i32_0 : i32, i32
  }
  func.func @transform_5(%arg0: i32, %arg1: i32) -> (i32, i32) {
    %c0_i32 = arith.constant 0 : i32
    %c0_i32_0 = arith.constant 0 : i32
    %c0_i32_1 = arith.constant 0 : i32
    return %c0_i32, %c0_i32_0 : i32, i32
  }
  func.func @transform_6(%arg0: i32, %arg1: i32) -> (i32, i32) {
    %c0_i32 = arith.constant 0 : i32
    %c0_i32_0 = arith.constant 0 : i32
    %c0_i32_1 = arith.constant 0 : i32
    return %c0_i32, %c0_i32_0 : i32, i32
  }
  func.func @transform_7(%arg0: i32, %arg1: i32) -> (i32, i32) {
    %c0_i32 = arith.constant 0 : i32
    %c0_i32_0 = arith.constant 0 : i32
    %c0_i32_1 = arith.constant 0 : i32
    return %c0_i32, %c0_i32_0 : i32, i32
  }
  func.func @transform_8(%arg0: i32, %arg1: i32) -> (i32, i32) {
    %c1_i32 = arith.constant 1 : i32
    %0 = arith.muli %arg0, %c1_i32 : i32
    %1 = arith.addi %0, %arg1 : i32
    %c0_i32 = arith.constant 0 : i32
    %c0_i32_0 = arith.constant 0 : i32
    return %1, %c0_i32 : i32, i32
  }
  func.func @transform_9(%arg0: i32, %arg1: i32) -> (i32, i32, i32) {
    %c0_i32 = arith.constant 0 : i32
    %c0_i32_0 = arith.constant 0 : i32
    %c0_i32_1 = arith.constant 0 : i32
    return %arg0, %c0_i32, %c0_i32_0 : i32, i32, i32
  }
}

</mosaic_0001>

<llo_original>
// kernel: readout_forward.1
$region0: #{readout_forward.1}
  #allocation0 [shape = 'u32[]', space=smem, size = 0x4, offset = 0x4, fixed_abs, tag = 'smem constant byte address 0x4 - core index']
  #allocation1 [shape = 'u32[144,128]{1,0:T(1,128)}', space=vmem, size = 0x12000, scoped, tag = 'internal scratch']
  %s0 = inlined_call_operand.vmem [shape: s32[1,128], index: 0, kind: input, shape index: {}]
  %s1 = inlined_call_operand.vmem [shape: bf16[128,32], index: 1, kind: input, shape index: {}]
  %s2 = inlined_call_operand.vmem [shape: bf16[128,32], index: 2, kind: input, shape index: {}]
  %s3 = inlined_call_operand.vmem [shape: bf16[32,128], index: 3, kind: input, shape index: {}]
  %s4 = inlined_call_operand.vmem [shape: bf16[32,128], index: 4, kind: input, shape index: {}]
  %s5 = inlined_call_operand.vmem [shape: f32[1,128], index: 5, kind: input, shape index: {}]
  %s6 = inlined_call_operand.vmem [shape: bf16[32,128], index: 6, kind: input, shape index: {}]
  %s7 = inlined_call_operand.vmem [shape: f32[1,128], index: 7, kind: input, shape index: {}]
  %s8 = inlined_call_operand.vmem [shape: f32[128,10], index: 8, kind: output, shape index: {0}]
  %s9 = inlined_call_operand.vmem [shape: f32[1,8,128], index: 9, kind: output, shape index: {1}]
  %10 = xla_tuple %s8, %s9
  %s11 = sld [smem:[#allocation0]]
  $region54: #{readout_forward.1} parent=0
    _
  %s13 = ssub.s32 1, %s11
  %s14 = scalar_select 0, %s13, %s11
  // Predicated region
  $region2: #{readout_forward.1} parent=0 // pred_check
    _
  $region3: #{readout_forward.1} parent=0 // pred_check_branch
    %16 = sbr.rel (0) target = $region5
  $region4: #{readout_forward.1} parent=0 // pred_region
    %s17 = sadd.s32 0, 0
    %p18 = scmp.lt.s32.totalorder %s17, 0
    %s19 = scalar_select %p18, %s17, 0
    %s20 = scalar_lea.vmem %s0, %s19
    %s21 = sadd.s32 0, 0
  $region5: #{readout_forward.1} parent=0 // pred_fallthru
    _
  // Predicated region
  $region6: #{readout_forward.1} parent=0 // pred_check
    _
  $region7: #{readout_forward.1} parent=0 // pred_check_branch
    %23 = sbr.rel (0) target = $region9
  $region8: #{readout_forward.1} parent=0 // pred_region
    %s24 = sadd.s32 0, 0
    %s25 = smul.u32 16, %s24
    %p26 = scmp.lt.s32.totalorder %s25, 15
    %s27 = scalar_select %p26, %s25, 15
    %s28 = smul.addr %s27, 4
    %s29 = scalar_lea.vmem %s1, %s28
    %s30 = sadd.s32 0, 0
    %s31 = smul.u32 16, %s30
  $region9: #{readout_forward.1} parent=0 // pred_fallthru
    _
  // Predicated region
  $region10: #{readout_forward.1} parent=0 // pred_check
    _
  $region11: #{readout_forward.1} parent=0 // pred_check_branch
    %33 = sbr.rel (0) target = $region13
  $region12: #{readout_forward.1} parent=0 // pred_region
    %s34 = sadd.s32 0, 0
    %s35 = smul.u32 16, %s34
    %p36 = scmp.lt.s32.totalorder %s35, 15
    %s37 = scalar_select %p36, %s35, 15
    %s38 = smul.addr %s37, 4
    %s39 = scalar_lea.vmem %s2, %s38
    %s40 = sadd.s32 0, 0
    %s41 = smul.u32 16, %s40
  $region13: #{readout_forward.1} parent=0 // pred_fallthru
    _
  // Predicated region
  $region14: #{readout_forward.1} parent=0 // pred_check
    _
  $region15: #{readout_forward.1} parent=0 // pred_check_branch
    %43 = sbr.rel (0) target = $region17
  $region16: #{readout_forward.1} parent=0 // pred_region
    _
  $region17: #{readout_forward.1} parent=0 // pred_fallthru
    _
  // Predicated region
  $region18: #{readout_forward.1} parent=0 // pred_check
    _
  $region19: #{readout_forward.1} parent=0 // pred_check_branch
    %45 = sbr.rel (0) target = $region21
  $region20: #{readout_forward.1} parent=0 // pred_region
    _
  $region21: #{readout_forward.1} parent=0 // pred_fallthru
    _
  // Predicated region
  $region22: #{readout_forward.1} parent=0 // pred_check
    _
  $region23: #{readout_forward.1} parent=0 // pred_check_branch
    %47 = sbr.rel (0) target = $region25
  $region24: #{readout_forward.1} parent=0 // pred_region
    _
  $region25: #{readout_forward.1} parent=0 // pred_fallthru
    _
  // Predicated region
  $region26: #{readout_forward.1} parent=0 // pred_check
    _
  $region27: #{readout_forward.1} parent=0 // pred_check_branch
    %49 = sbr.rel (0) target = $region29
  $region28: #{readout_forward.1} parent=0 // pred_region
    _
  $region29: #{readout_forward.1} parent=0 // pred_fallthru
    _
  // Predicated region
  $region30: #{readout_forward.1} parent=0 // pred_check
    _
  $region31: #{readout_forward.1} parent=0 // pred_check_branch
    %51 = sbr.rel (0) target = $region33
  $region32: #{readout_forward.1} parent=0 // pred_region
    _
  $region33: #{readout_forward.1} parent=0 // pred_fallthru
    _
  %s52 = sadd.s32 0, 0
  %p53 = scmp.lt.s32.totalorder %s52, 0
  %s54 = scalar_select %p53, %s52, 0
  %s55 = scalar_lea.vmem %s0, %s54
  %s56 = sadd.s32 0, 0
  %s57 = smul.u32 16, %s56
  %p58 = scmp.lt.s32.totalorder %s57, 15
  %s59 = scalar_select %p58, %s57, 15
  %s60 = smul.addr %s59, 4
  %s61 = scalar_lea.vmem %s1, %s60
  %s62 = sadd.s32 0, 0
  %s63 = smul.u32 16, %s62
  %p64 = scmp.lt.s32.totalorder %s63, 15
  %s65 = scalar_select %p64, %s63, 15
  %s66 = smul.addr %s65, 4
  %s67 = scalar_lea.vmem %s2, %s66
  %s68 = sadd.s32 0, 0
  %s69 = smul.u32 16, %s68
  %p70 = scmp.lt.s32.totalorder %s69, 15
  %s71 = scalar_select %p70, %s69, 15
  %s72 = smul.addr %s71, 8
  %s73 = scalar_lea.vmem %s8, %s72
  %s74 = sadd.s32 0, 0
  %p75 = scmp.lt.s32.totalorder %s74, 0
  %s76 = scalar_select %p75, %s74, 0
  %s77 = scalar_lea.vmem %s0, %s76
  %s78 = sadd.s32 0, 0
  %s79 = sadd.s32 0, 0
  %s80 = smul.u32 16, %s79
  %p81 = scmp.lt.s32.totalorder %s80, 15
  %s82 = scalar_select %p81, %s80, 15
  %s83 = smul.addr %s82, 4
  %s84 = scalar_lea.vmem %s1, %s83
  %s85 = sadd.s32 0, 0
  %s86 = smul.u32 16, %s85
  %s87 = sadd.s32 0, 0
  %s88 = smul.u32 16, %s87
  %p89 = scmp.lt.s32.totalorder %s88, 15
  %s90 = scalar_select %p89, %s88, 15
  %s91 = smul.addr %s90, 4
  %s92 = scalar_lea.vmem %s2, %s91
  %s93 = sadd.s32 0, 0
  %s94 = smul.u32 16, %s93
  %s95 = sadd.s32 0, 0
  %s96 = smul.u32 16, %s95
  %p97 = scmp.lt.s32.totalorder %s96, 15
  %s98 = scalar_select %p97, %s96, 15
  %s99 = smul.addr %s98, 8
  %s100 = scalar_lea.vmem %s8, %s99
  %s101 = sadd.s32 0, 0
  %s102 = smul.u32 16, %s101
  %v104 = vld [vmem:[%s84] sm:$0xf]
  %v105 = vld [vmem:[%s84 + $0x4] sm:$0xf]
  %v106 = vld [vmem:[%s84 + $0x8] sm:$0xf]
  %v107 = vld [vmem:[%s84 + $0xc] sm:$0xf]
  %v108 = vld [vmem:[%s84 + $0x10] sm:$0xf]
  %v109 = vld [vmem:[%s84 + $0x14] sm:$0xf]
  %v110 = vld [vmem:[%s84 + $0x18] sm:$0xf]
  %v111 = vld [vmem:[%s84 + $0x1c] sm:$0xf]
  %v112 = vld [vmem:[%s84 + $0x20] sm:$0xf]
  %v113 = vld [vmem:[%s84 + $0x24] sm:$0xf]
  %v114 = vld [vmem:[%s84 + $0x28] sm:$0xf]
  %v115 = vld [vmem:[%s84 + $0x2c] sm:$0xf]
  %v116 = vld [vmem:[%s84 + $0x30] sm:$0xf]
  %v117 = vld [vmem:[%s84 + $0x34] sm:$0xf]
  %v118 = vld [vmem:[%s84 + $0x38] sm:$0xf]
  %v119 = vld [vmem:[%s84 + $0x3c] sm:$0xf]
  %v120 = vld [vmem:[%s92] sm:$0xf]
  %v121 = vld [vmem:[%s92 + $0x4] sm:$0xf]
  %v122 = vld [vmem:[%s92 + $0x8] sm:$0xf]
  %v123 = vld [vmem:[%s92 + $0xc] sm:$0xf]
  %v124 = vld [vmem:[%s92 + $0x10] sm:$0xf]
  %v125 = vld [vmem:[%s92 + $0x14] sm:$0xf]
  %v126 = vld [vmem:[%s92 + $0x18] sm:$0xf]
  %v127 = vld [vmem:[%s92 + $0x1c] sm:$0xf]
  %v128 = vld [vmem:[%s92 + $0x20] sm:$0xf]
  %v129 = vld [vmem:[%s92 + $0x24] sm:$0xf]
  %v130 = vld [vmem:[%s92 + $0x28] sm:$0xf]
  %v131 = vld [vmem:[%s92 + $0x2c] sm:$0xf]
  %v132 = vld [vmem:[%s92 + $0x30] sm:$0xf]
  %v133 = vld [vmem:[%s92 + $0x34] sm:$0xf]
  %v134 = vld [vmem:[%s92 + $0x38] sm:$0xf]
  %v135 = vld [vmem:[%s92 + $0x3c] sm:$0xf]
  %v136 = vld [vmem:[%s3] sm:$0xf]
  %v137 = vld [vmem:[%s3 + $0x4] sm:$0xf]
  %v138 = vld [vmem:[%s3 + $0x8] sm:$0xf]
  %v139 = vld [vmem:[%s3 + $0xc] sm:$0xf]
  %v140 = vld [vmem:[%s4] sm:$0xf]
  %v141 = vld [vmem:[%s4 + $0x4] sm:$0xf]
  %v142 = vld [vmem:[%s4 + $0x8] sm:$0xf]
  %v143 = vld [vmem:[%s4 + $0xc] sm:$0xf]
  %v160 = vunpack.c.l.b16 %v120
  %v161 = vunpack.c.l.b16 %v121
  %v162 = vunpack.c.l.b16 %v122
  %v163 = vunpack.c.l.b16 %v123
  %v164 = vunpack.c.l.b16 %v124
  %v165 = vunpack.c.l.b16 %v125
  %v166 = vunpack.c.l.b16 %v126
  %v167 = vunpack.c.l.b16 %v127
  %v168 = vunpack.c.l.b16 %v128
  %v169 = vunpack.c.l.b16 %v129
  %v170 = vunpack.c.l.b16 %v130
  %v171 = vunpack.c.l.b16 %v131
  %v172 = vunpack.c.l.b16 %v132
  %v173 = vunpack.c.l.b16 %v133
  %v174 = vunpack.c.l.b16 %v134
  %v175 = vunpack.c.l.b16 %v135
  %v176 = vpack.c.b16 %v161, %v160
  %v177 = vpack.c.b16 %v163, %v162
  %v178 = vpack.c.b16 %v165, %v164
  %v179 = vpack.c.b16 %v167, %v166
  %v180 = vpack.c.b16 %v169, %v168
  %v181 = vpack.c.b16 %v171, %v170
  %v182 = vpack.c.b16 %v173, %v172
  %v183 = vpack.c.b16 %v175, %v174
  %v188 = vunpack.c.l.b16 %v140
  %v189 = vunpack.c.l.b16 %v141
  %v190 = vunpack.c.l.b16 %v142
  %v191 = vunpack.c.l.b16 %v143
  %v192 = vpack.c.b16 %v189, %v188
  %v193 = vpack.c.b16 %v191, %v190
  %vm196 = vcmask 261120
  %v198 = vsel %vm196, %v176, 0
  %v201 = vsel %vm196, %v177, 0
  %v204 = vsel %vm196, %v178, 0
  %v207 = vsel %vm196, %v179, 0
  %v210 = vsel %vm196, %v180, 0
  %v213 = vsel %vm196, %v181, 0
  %v216 = vsel %vm196, %v182, 0
  %v219 = vsel %vm196, %v183, 0
  %221 = vmatprep.subr.bf16.mxu0 0
  %222 = vmatpush1.bf16.msra.mxu0 0
  %223 = vmatprep.subr.bf16.mxu0 0
  %224 = vmatpush1.bf16.msra.mxu0 0
  %225 = vmatprep.subr.bf16.mxu0 0
  %226 = vmatpush1.bf16.msra.mxu0 0
  %227 = vmatprep.subr.bf16.mxu0 0
  %228 = vmatpush1.bf16.msra.mxu0 0
  %229 = vmatprep.subr.bf16.mxu0 0
  %230 = vmatpush1.bf16.msra.mxu0 0
  %231 = vmatprep.subr.bf16.mxu0 0
  %232 = vmatpush1.bf16.msra.mxu0 0
  %233 = vmatprep.subr.bf16.mxu0 0
  %234 = vmatpush1.bf16.msra.mxu0 %v193
  %235 = vmatprep.subr.bf16.mxu0 0
  %236 = vmatpush1.bf16.msra.mxu0 %v192
  %237 = vmatprep.subr.bf16.mxu0 0
  %238 = vmatpush2.bf16.msra.mxu0 0
  %239 = vmatprep.subr.bf16.mxu0 0
  %240 = vmatpush2.bf16.msra.mxu0 0
  %241 = vmatprep.subr.bf16.mxu0 0
  %242 = vmatpush2.bf16.msra.mxu0 0
  %243 = vmatprep.subr.bf16.mxu0 0
  %244 = vmatpush2.bf16.msra.mxu0 0
  %245 = vmatprep.subr.bf16.mxu0 0
  %246 = vmatpush2.bf16.msra.mxu0 0
  %247 = vmatprep.subr.bf16.mxu0 0
  %248 = vmatpush2.bf16.msra.mxu0 0
  %249 = vmatprep.subr.bf16.mxu0 0
  %250 = vmatpush2.bf16.msra.mxu0 0
  %251 = vmatprep.subr.bf16.mxu0 0
  %252 = vmatpush2.bf16.msra.mxu0 0
  %253 = vmatprep.mubr.bf16.mxu0 0
  %254 = vmatmul.mubr.bf16.gmra.mxu0 %v198
  %v255 = vpop.f32.mrf.mxu0
  %v256 = vadd.f32 0.0, %v255
  %v257 = vpop.f32.mrf.mxu0
  %v258 = vpop.f32.mrf.mxu0
  %v259 = vadd.f32 0.0, %v258
  %v260 = vpop.f32.mrf.mxu0
  %261 = vmatprep.mubr.bf16.mxu0 0
  %262 = vmatmul.mubr.bf16.gmra.mxu0 %v201
  %v263 = vpop.f32.mrf.mxu0
  %v264 = vadd.f32 0.0, %v263
  %v265 = vpop.f32.mrf.mxu0
  %v266 = vpop.f32.mrf.mxu0
  %v267 = vadd.f32 0.0, %v266
  %v268 = vpop.f32.mrf.mxu0
  %269 = vmatprep.mubr.bf16.mxu0 0
  %270 = vmatmul.mubr.bf16.gmra.mxu0 %v204
  %v271 = vpop.f32.mrf.mxu0
  %v272 = vadd.f32 0.0, %v271
  %v273 = vpop.f32.mrf.mxu0
  %v274 = vpop.f32.mrf.mxu0
  %v275 = vadd.f32 0.0, %v274
  %v276 = vpop.f32.mrf.mxu0
  %277 = vmatprep.mubr.bf16.mxu0 0
  %278 = vmatmul.mubr.bf16.gmra.mxu0 %v207
  %v279 = vpop.f32.mrf.mxu0
  %v280 = vadd.f32 0.0, %v279
  %v281 = vpop.f32.mrf.mxu0
  %v282 = vpop.f32.mrf.mxu0
  %v283 = vadd.f32 0.0, %v282
  %v284 = vpop.f32.mrf.mxu0
  %285 = vmatprep.mubr.bf16.mxu0 0
  %286 = vmatmul.mubr.bf16.gmra.mxu0 %v210
  %v287 = vpop.f32.mrf.mxu0
  %v288 = vadd.f32 0.0, %v287
  %v289 = vpop.f32.mrf.mxu0
  %v290 = vpop.f32.mrf.mxu0
  %v291 = vadd.f32 0.0, %v290
  %v292 = vpop.f32.mrf.mxu0
  %293 = vmatprep.mubr.bf16.mxu0 0
  %294 = vmatmul.mubr.bf16.gmra.mxu0 %v213
  %v295 = vpop.f32.mrf.mxu0
  %v296 = vadd.f32 0.0, %v295
  %v297 = vpop.f32.mrf.mxu0
  %v298 = vpop.f32.mrf.mxu0
  %v299 = vadd.f32 0.0, %v298
  %v300 = vpop.f32.mrf.mxu0
  %301 = vmatprep.mubr.bf16.mxu0 0
  %302 = vmatmul.mubr.bf16.gmra.mxu0 %v216
  %v303 = vpop.f32.mrf.mxu0
  %v304 = vadd.f32 0.0, %v303
  %v305 = vpop.f32.mrf.mxu0
  %v306 = vpop.f32.mrf.mxu0
  %v307 = vadd.f32 0.0, %v306
  %v308 = vpop.f32.mrf.mxu0
  %309 = vmatprep.mubr.bf16.mxu0 0
  %310 = vmatmul.mubr.bf16.gmra.mxu0 %v219
  %v311 = vpop.f32.mrf.mxu0
  %v312 = vadd.f32 0.0, %v311
  %v313 = vpop.f32.mrf.mxu0
  %v314 = vpop.f32.mrf.mxu0
  %v315 = vadd.f32 0.0, %v314
  %v316 = vpop.f32.mrf.mxu0
  %317 = vdwg.mxu0
  %v334 = vunpack.c.l.b16 %v104
  %v335 = vunpack.c.l.b16 %v105
  %v336 = vunpack.c.l.b16 %v106
  %v337 = vunpack.c.l.b16 %v107
  %v338 = vunpack.c.l.b16 %v108
  %v339 = vunpack.c.l.b16 %v109
  %v340 = vunpack.c.l.b16 %v110
  %v341 = vunpack.c.l.b16 %v111
  %v342 = vunpack.c.l.b16 %v112
  %v343 = vunpack.c.l.b16 %v113
  %v344 = vunpack.c.l.b16 %v114
  %v345 = vunpack.c.l.b16 %v115
  %v346 = vunpack.c.l.b16 %v116
  %v347 = vunpack.c.l.b16 %v117
  %v348 = vunpack.c.l.b16 %v118
  %v349 = vunpack.c.l.b16 %v119
  %v350 = vpack.c.b16 %v335, %v334
  %v351 = vpack.c.b16 %v337, %v336
  %v352 = vpack.c.b16 %v339, %v338
  %v353 = vpack.c.b16 %v341, %v340
  %v354 = vpack.c.b16 %v343, %v342
  %v355 = vpack.c.b16 %v345, %v344
  %v356 = vpack.c.b16 %v347, %v346
  %v357 = vpack.c.b16 %v349, %v348
  %v362 = vunpack.c.l.b16 %v136
  %v363 = vunpack.c.l.b16 %v137
  %v364 = vunpack.c.l.b16 %v138
  %v365 = vunpack.c.l.b16 %v139
  %v366 = vpack.c.b16 %v363, %v362
  %v367 = vpack.c.b16 %v365, %v364
  %v371 = vsel %vm196, %v350, 0
  %v374 = vsel %vm196, %v351, 0
  %v377 = vsel %vm196, %v352, 0
  %v380 = vsel %vm196, %v353, 0
  %v383 = vsel %vm196, %v354, 0
  %v386 = vsel %vm196, %v355, 0
  %v389 = vsel %vm196, %v356, 0
  %v392 = vsel %vm196, %v357, 0
  %394 = vmatprep.subr.bf16.mxu0 0
  %395 = vmatpush1.bf16.msra.mxu0 0
  %396 = vmatprep.subr.bf16.mxu0 0
  %397 = vmatpush1.bf16.msra.mxu0 0
  %398 = vmatprep.subr.bf16.mxu0 0
  %399 = vmatpush1.bf16.msra.mxu0 0
  %400 = vmatprep.subr.bf16.mxu0 0
  %401 = vmatpush1.bf16.msra.mxu0 0
  %402 = vmatprep.subr.bf16.mxu0 0
  %403 = vmatpush1.bf16.msra.mxu0 0
  %404 = vmatprep.subr.bf16.mxu0 0
  %405 = vmatpush1.bf16.msra.mxu0 0
  %406 = vmatprep.subr.bf16.mxu0 0
  %407 = vmatpush1.bf16.msra.mxu0 %v367
  %408 = vmatprep.subr.bf16.mxu0 0
  %409 = vmatpush1.bf16.msra.mxu0 %v366
  %410 = vmatprep.subr.bf16.mxu0 0
  %411 = vmatpush2.bf16.msra.mxu0 0
  %412 = vmatprep.subr.bf16.mxu0 0
  %413 = vmatpush2.bf16.msra.mxu0 0
  %414 = vmatprep.subr.bf16.mxu0 0
  %415 = vmatpush2.bf16.msra.mxu0 0
  %416 = vmatprep.subr.bf16.mxu0 0
  %417 = vmatpush2.bf16.msra.mxu0 0
  %418 = vmatprep.subr.bf16.mxu0 0
  %419 = vmatpush2.bf16.msra.mxu0 0
  %420 = vmatprep.subr.bf16.mxu0 0
  %421 = vmatpush2.bf16.msra.mxu0 0
  %422 = vmatprep.subr.bf16.mxu0 0
  %423 = vmatpush2.bf16.msra.mxu0 0
  %424 = vmatprep.subr.bf16.mxu0 0
  %425 = vmatpush2.bf16.msra.mxu0 0
  %426 = vmatprep.mubr.bf16.mxu0 0
  %427 = vmatmul.mubr.bf16.gmra.mxu0 %v371
  %v428 = vpop.f32.mrf.mxu0
  %v429 = vadd.f32 %v256, %v428
  %v430 = vpop.f32.mrf.mxu0
  %v431 = vpop.f32.mrf.mxu0
  %v432 = vadd.f32 %v259, %v431
  %v433 = vpop.f32.mrf.mxu0
  %434 = vmatprep.mubr.bf16.mxu0 0
  %435 = vmatmul.mubr.bf16.gmra.mxu0 %v374
  %v436 = vpop.f32.mrf.mxu0
  %v437 = vadd.f32 %v264, %v436
  %v438 = vpop.f32.mrf.mxu0
  %v439 = vpop.f32.mrf.mxu0
  %v440 = vadd.f32 %v267, %v439
  %v441 = vpop.f32.mrf.mxu0
  %442 = vmatprep.mubr.bf16.mxu0 0
  %443 = vmatmul.mubr.bf16.gmra.mxu0 %v377
  %v444 = vpop.f32.mrf.mxu0
  %v445 = vadd.f32 %v272, %v444
  %v446 = vpop.f32.mrf.mxu0
  %v447 = vpop.f32.mrf.mxu0
  %v448 = vadd.f32 %v275, %v447
  %v449 = vpop.f32.mrf.mxu0
  %450 = vmatprep.mubr.bf16.mxu0 0
  %451 = vmatmul.mubr.bf16.gmra.mxu0 %v380
  %v452 = vpop.f32.mrf.mxu0
  %v453 = vadd.f32 %v280, %v452
  %v454 = vpop.f32.mrf.mxu0
  %v455 = vpop.f32.mrf.mxu0
  %v456 = vadd.f32 %v283, %v455
  %v457 = vpop.f32.mrf.mxu0
  %458 = vmatprep.mubr.bf16.mxu0 0
  %459 = vmatmul.mubr.bf16.gmra.mxu0 %v383
  %v460 = vpop.f32.mrf.mxu0
  %v461 = vadd.f32 %v288, %v460
  %v462 = vpop.f32.mrf.mxu0
  %v463 = vpop.f32.mrf.mxu0
  %v464 = vadd.f32 %v291, %v463
  %v465 = vpop.f32.mrf.mxu0
  %466 = vmatprep.mubr.bf16.mxu0 0
  %467 = vmatmul.mubr.bf16.gmra.mxu0 %v386
  %v468 = vpop.f32.mrf.mxu0
  %v469 = vadd.f32 %v296, %v468
  %v470 = vpop.f32.mrf.mxu0
  %v471 = vpop.f32.mrf.mxu0
  %v472 = vadd.f32 %v299, %v471
  %v473 = vpop.f32.mrf.mxu0
  %474 = vmatprep.mubr.bf16.mxu0 0
  %475 = vmatmul.mubr.bf16.gmra.mxu0 %v389
  %v476 = vpop.f32.mrf.mxu0
  %v477 = vadd.f32 %v304, %v476
  %v478 = vpop.f32.mrf.mxu0
  %v479 = vpop.f32.mrf.mxu0
  %v480 = vadd.f32 %v307, %v479
  %v481 = vpop.f32.mrf.mxu0
  %482 = vmatprep.mubr.bf16.mxu0 0
  %483 = vmatmul.mubr.bf16.gmra.mxu0 %v392
  %v484 = vpop.f32.mrf.mxu0
  %v485 = vadd.f32 %v312, %v484
  %v486 = vpop.f32.mrf.mxu0
  %v487 = vpop.f32.mrf.mxu0
  %v488 = vadd.f32 %v315, %v487
  %v489 = vpop.f32.mrf.mxu0
  %490 = vdwg.mxu0
  %v491 = vld [vmem:[%s5] sm:$0x1]
  %v493 = vlaneseq
  %v494 = vshrl.u32 %v493, 7
  %v495 = vsub.s32 0, %v494
  %v496 = vrot.slane %v491, %v495
  %v498 = vadd.f32 %v429, %v496
  %v499 = vadd.f32 %v432, %v496
  %v500 = vadd.f32 %v437, %v496
  %v501 = vadd.f32 %v440, %v496
  %v502 = vadd.f32 %v445, %v496
  %v503 = vadd.f32 %v448, %v496
  %v504 = vadd.f32 %v453, %v496
  %v505 = vadd.f32 %v456, %v496
  %v506 = vadd.f32 %v461, %v496
  %v507 = vadd.f32 %v464, %v496
  %v508 = vadd.f32 %v469, %v496
  %v509 = vadd.f32 %v472, %v496
  %v510 = vadd.f32 %v477, %v496
  %v511 = vadd.f32 %v480, %v496
  %v512 = vadd.f32 %v485, %v496
  %v513 = vadd.f32 %v488, %v496
  %v514 = vxor.u32 %v498, 2147483648
  %v515 = vxor.u32 %v499, 2147483648
  %v516 = vxor.u32 %v500, 2147483648
  %v517 = vxor.u32 %v501, 2147483648
  %v518 = vxor.u32 %v502, 2147483648
  %v519 = vxor.u32 %v503, 2147483648
  %v520 = vxor.u32 %v504, 2147483648
  %v521 = vxor.u32 %v505, 2147483648
  %v522 = vxor.u32 %v506, 2147483648
  %v523 = vxor.u32 %v507, 2147483648
  %v524 = vxor.u32 %v508, 2147483648
  %v525 = vxor.u32 %v509, 2147483648
  %v526 = vxor.u32 %v510, 2147483648
  %v527 = vxor.u32 %v511, 2147483648
  %v528 = vxor.u32 %v512, 2147483648
  %v529 = vxor.u32 %v513, 2147483648
  %v530 = vmul.f32 %v514, 1.442695
  %v531 = vpow.pop %v530
  %v532 = vmul.f32 %v515, 1.442695
  %v533 = vpow.pop %v532
  %v534 = vmul.f32 %v516, 1.442695
  %v535 = vpow.pop %v534
  %v536 = vmul.f32 %v517, 1.442695
  %v537 = vpow.pop %v536
  %v538 = vmul.f32 %v518, 1.442695
  %v539 = vpow.pop %v538
  %v540 = vmul.f32 %v519, 1.442695
  %v541 = vpow.pop %v540
  %v542 = vmul.f32 %v520, 1.442695
  %v543 = vpow.pop %v542
  %v544 = vmul.f32 %v521, 1.442695
  %v545 = vpow.pop %v544
  %v546 = vmul.f32 %v522, 1.442695
  %v547 = vpow.pop %v546
  %v548 = vmul.f32 %v523, 1.442695
  %v549 = vpow.pop %v548
  %v550 = vmul.f32 %v524, 1.442695
  %v551 = vpow.pop %v550
  %v552 = vmul.f32 %v525, 1.442695
  %v553 = vpow.pop %v552
  %v554 = vmul.f32 %v526, 1.442695
  %v555 = vpow.pop %v554
  %v556 = vmul.f32 %v527, 1.442695
  %v557 = vpow.pop %v556
  %v558 = vmul.f32 %v528, 1.442695
  %v559 = vpow.pop %v558
  %v560 = vmul.f32 %v529, 1.442695
  %v561 = vpow.pop %v560
  %v562 = vadd.f32 %v531, 1.0
  %v563 = vadd.f32 %v533, 1.0
  %v564 = vadd.f32 %v535, 1.0
  %v565 = vadd.f32 %v537, 1.0
  %v566 = vadd.f32 %v539, 1.0
  %v567 = vadd.f32 %v541, 1.0
  %v568 = vadd.f32 %v543, 1.0
  %v569 = vadd.f32 %v545, 1.0
  %v570 = vadd.f32 %v547, 1.0
  %v571 = vadd.f32 %v549, 1.0
  %v572 = vadd.f32 %v551, 1.0
  %v573 = vadd.f32 %v553, 1.0
  %v574 = vadd.f32 %v555, 1.0
  %v575 = vadd.f32 %v557, 1.0
  %v576 = vadd.f32 %v559, 1.0
  %v577 = vadd.f32 %v561, 1.0
  %v578 = vrcp.pop %v562
  %v579 = vmul.f32 1.0, %v578
  %v580 = vrcp.pop %v563
  %v581 = vmul.f32 1.0, %v580
  %v582 = vrcp.pop %v564
  %v583 = vmul.f32 1.0, %v582
  %v584 = vrcp.pop %v565
  %v585 = vmul.f32 1.0, %v584
  %v586 = vrcp.pop %v566
  %v587 = vmul.f32 1.0, %v586
  %v588 = vrcp.pop %v567
  %v589 = vmul.f32 1.0, %v588
  %v590 = vrcp.pop %v568
  %v591 = vmul.f32 1.0, %v590
  %v592 = vrcp.pop %v569
  %v593 = vmul.f32 1.0, %v592
  %v594 = vrcp.pop %v570
  %v595 = vmul.f32 1.0, %v594
  %v596 = vrcp.pop %v571
  %v597 = vmul.f32 1.0, %v596
  %v598 = vrcp.pop %v572
  %v599 = vmul.f32 1.0, %v598
  %v600 = vrcp.pop %v573
  %v601 = vmul.f32 1.0, %v600
  %v602 = vrcp.pop %v574
  %v603 = vmul.f32 1.0, %v602
  %v604 = vrcp.pop %v575
  %v605 = vmul.f32 1.0, %v604
  %v606 = vrcp.pop %v576
  %v607 = vmul.f32 1.0, %v606
  %v608 = vrcp.pop %v577
  %v609 = vmul.f32 1.0, %v608
  %v610 = vld [vmem:[%s6] sm:$0xf]
  %v611 = vld [vmem:[%s6 + $0x4] sm:$0xf]
  %v612 = vld [vmem:[%s6 + $0x8] sm:$0xf]
  %v613 = vld [vmem:[%s6 + $0xc] sm:$0xf]
  %v614 = vld [vmem:[%s7] sm:$0x1]
  %v616 = vlaneseq
  %v617 = vshrl.u32 %v616, 7
  %v618 = vsub.s32 0, %v617
  %v619 = vrot.slane %v614, %v618
  %v625 = vunpack.c.l.b16 %v610
  %v626 = vunpack.c.l.b16 %v611
  %v627 = vunpack.c.l.b16 %v612
  %v628 = vunpack.c.l.b16 %v613
  %v629 = vpack.c.b16 %v626, %v625
  %v630 = vpack.c.b16 %v628, %v627
  %633 = vmatprep.subr.bf16.mxu0 0
  %634 = vmatpush1.bf16.msra.mxu0 0
  %635 = vmatprep.subr.bf16.mxu0 0
  %636 = vmatpush1.bf16.msra.mxu0 0
  %637 = vmatprep.subr.bf16.mxu0 0
  %638 = vmatpush1.bf16.msra.mxu0 0
  %639 = vmatprep.subr.bf16.mxu0 0
  %640 = vmatpush1.bf16.msra.mxu0 0
  %641 = vmatprep.subr.bf16.mxu0 0
  %642 = vmatpush1.bf16.msra.mxu0 0
  %643 = vmatprep.subr.bf16.mxu0 0
  %644 = vmatpush1.bf16.msra.mxu0 0
  %645 = vmatprep.subr.bf16.mxu0 0
  %646 = vmatpush1.bf16.msra.mxu0 %v630
  %647 = vmatprep.subr.bf16.mxu0 0
  %648 = vmatpush1.bf16.msra.mxu0 %v629
  %649 = vmatprep.subr.bf16.mxu0 0
  %650 = vmatpush2.bf16.msra.mxu0 0
  %651 = vmatprep.subr.bf16.mxu0 0
  %652 = vmatpush2.bf16.msra.mxu0 0
  %653 = vmatprep.subr.bf16.mxu0 0
  %654 = vmatpush2.bf16.msra.mxu0 0
  %655 = vmatprep.subr.bf16.mxu0 0
  %656 = vmatpush2.bf16.msra.mxu0 0
  %657 = vmatprep.subr.bf16.mxu0 0
  %658 = vmatpush2.bf16.msra.mxu0 0
  %659 = vmatprep.subr.bf16.mxu0 0
  %660 = vmatpush2.bf16.msra.mxu0 0
  %661 = vmatprep.subr.bf16.mxu0 0
  %662 = vmatpush2.bf16.msra.mxu0 0
  %663 = vmatprep.subr.bf16.mxu0 0
  %664 = vmatpush2.bf16.msra.mxu0 0
  %665 = vmatprep.mubr.bf16.mxu0 0
  %666 = vmatmul.mubr.bf16.gmra.mxu0 %v198
  %v667 = vpop.f32.mrf.mxu0
  %v668 = vadd.f32 %v619, %v667
  %v669 = vpop.f32.mrf.mxu0
  %v670 = vpop.f32.mrf.mxu0
  %v671 = vadd.f32 %v619, %v670
  %v672 = vpop.f32.mrf.mxu0
  %673 = vmatprep.mubr.bf16.mxu0 0
  %674 = vmatmul.mubr.bf16.gmra.mxu0 %v201
  %v675 = vpop.f32.mrf.mxu0
  %v676 = vadd.f32 %v619, %v675
  %v677 = vpop.f32.mrf.mxu0
  %v678 = vpop.f32.mrf.mxu0
  %v679 = vadd.f32 %v619, %v678
  %v680 = vpop.f32.mrf.mxu0
  %681 = vmatprep.mubr.bf16.mxu0 0
  %682 = vmatmul.mubr.bf16.gmra.mxu0 %v204
  %v683 = vpop.f32.mrf.mxu0
  %v684 = vadd.f32 %v619, %v683
  %v685 = vpop.f32.mrf.mxu0
  %v686 = vpop.f32.mrf.mxu0
  %v687 = vadd.f32 %v619, %v686
  %v688 = vpop.f32.mrf.mxu0
  %689 = vmatprep.mubr.bf16.mxu0 0
  %690 = vmatmul.mubr.bf16.gmra.mxu0 %v207
  %v691 = vpop.f32.mrf.mxu0
  %v692 = vadd.f32 %v619, %v691
  %v693 = vpop.f32.mrf.mxu0
  %v694 = vpop.f32.mrf.mxu0
  %v695 = vadd.f32 %v619, %v694
  %v696 = vpop.f32.mrf.mxu0
  %697 = vmatprep.mubr.bf16.mxu0 0
  %698 = vmatmul.mubr.bf16.gmra.mxu0 %v210
  %v699 = vpop.f32.mrf.mxu0
  %v700 = vadd.f32 %v619, %v699
  %v701 = vpop.f32.mrf.mxu0
  %v702 = vpop.f32.mrf.mxu0
  %v703 = vadd.f32 %v619, %v702
  %v704 = vpop.f32.mrf.mxu0
  %705 = vmatprep.mubr.bf16.mxu0 0
  %706 = vmatmul.mubr.bf16.gmra.mxu0 %v213
  %v707 = vpop.f32.mrf.mxu0
  %v708 = vadd.f32 %v619, %v707
  %v709 = vpop.f32.mrf.mxu0
  %v710 = vpop.f32.mrf.mxu0
  %v711 = vadd.f32 %v619, %v710
  %v712 = vpop.f32.mrf.mxu0
  %713 = vmatprep.mubr.bf16.mxu0 0
  %714 = vmatmul.mubr.bf16.gmra.mxu0 %v216
  %v715 = vpop.f32.mrf.mxu0
  %v716 = vadd.f32 %v619, %v715
  %v717 = vpop.f32.mrf.mxu0
  %v718 = vpop.f32.mrf.mxu0
  %v719 = vadd.f32 %v619, %v718
  %v720 = vpop.f32.mrf.mxu0
  %721 = vmatprep.mubr.bf16.mxu0 0
  %722 = vmatmul.mubr.bf16.gmra.mxu0 %v219
  %v723 = vpop.f32.mrf.mxu0
  %v724 = vadd.f32 %v619, %v723
  %v725 = vpop.f32.mrf.mxu0
  %v726 = vpop.f32.mrf.mxu0
  %v727 = vadd.f32 %v619, %v726
  %v728 = vpop.f32.mrf.mxu0
  %729 = vdwg.mxu0
  %v730 = vmul.f32 %v579, %v668
  %v731 = vmul.f32 %v581, %v671
  %v732 = vmul.f32 %v583, %v676
  %v733 = vmul.f32 %v585, %v679
  %v734 = vmul.f32 %v587, %v684
  %v735 = vmul.f32 %v589, %v687
  %v736 = vmul.f32 %v591, %v692
  %v737 = vmul.f32 %v593, %v695
  %v738 = vmul.f32 %v595, %v700
  %v739 = vmul.f32 %v597, %v703
  %v740 = vmul.f32 %v599, %v708
  %v741 = vmul.f32 %v601, %v711
  %v742 = vmul.f32 %v603, %v716
  %v743 = vmul.f32 %v605, %v719
  %v744 = vmul.f32 %v607, %v724
  %v745 = vmul.f32 %v609, %v727
  %vm746 = vcmask 80896
  %747 = vst.msk [vmem:[%s100] sm:$0xff] %vm746, %v730
  %748 = vst.msk [vmem:[%s100 + $0x8] sm:$0xff] %vm746, %v731
  %749 = vst.msk [vmem:[%s100 + $0x10] sm:$0xff] %vm746, %v732
  %750 = vst.msk [vmem:[%s100 + $0x18] sm:$0xff] %vm746, %v733
  %751 = vst.msk [vmem:[%s100 + $0x20] sm:$0xff] %vm746, %v734
  %752 = vst.msk [vmem:[%s100 + $0x28] sm:$0xff] %vm746, %v735
  %753 = vst.msk [vmem:[%s100 + $0x30] sm:$0xff] %vm746, %v736
  %754 = vst.msk [vmem:[%s100 + $0x38] sm:$0xff] %vm746, %v737
  %755 = vst.msk [vmem:[%s100 + $0x40] sm:$0xff] %vm746, %v738
  %756 = vst.msk [vmem:[%s100 + $0x48] sm:$0xff] %vm746, %v739
  %757 = vst.msk [vmem:[%s100 + $0x50] sm:$0xff] %vm746, %v740
  %758 = vst.msk [vmem:[%s100 + $0x58] sm:$0xff] %vm746, %v741
  %759 = vst.msk [vmem:[%s100 + $0x60] sm:$0xff] %vm746, %v742
  %760 = vst.msk [vmem:[%s100 + $0x68] sm:$0xff] %vm746, %v743
  %761 = vst.msk [vmem:[%s100 + $0x70] sm:$0xff] %vm746, %v744
  %762 = vst.msk [vmem:[%s100 + $0x78] sm:$0xff] %vm746, %v745
  %p763 = scmp.eq.s32.totalorder 0, 0
  // Predicated region
  $region34: #{readout_forward.1} parent=0 // pred_check
    %p764 = pneg %p763
  $region35: #{readout_forward.1} parent=0 // pred_check_branch
    %766 = sbr.rel (%p764) target = $region37
  $region36: #{readout_forward.1} parent=0 // pred_region
    %767 = vst [vmem:[%s9] sm:$0xff] 0.0
  $region37: #{readout_forward.1} parent=0 // pred_fallthru
    _
  %v768 = vld [vmem:[%s77] sm:$0x1]
  %v769 = vlaneseq
  %v770 = vshrl.u32 %v769, 7
  %v771 = vlaneseq
  %v772 = vshrl.u32 %v771, 7
  %v773 = vsub.s32 0, %v772
  %v774 = vrot.slane %v768, %v773
  %vm775 = vcmp.eq.s32.totalorder %v770, %v774
  %v776 = vsel %vm775, 1, 0
  %v777 = vcvt.s32.f32 %v776
  %v778 = vld [vmem:[%s9] sm:$0xff]
  %779 = vmatprep.subr.mxu0 0.0
  %780 = vmatpush1.msra.mxu0 %v745
  %781 = vmatprep.subr.mxu0 0.0
  %782 = vmatpush1.msra.mxu0 %v744
  %783 = vmatprep.subr.mxu0 0.0
  %784 = vmatpush1.msra.mxu0 %v743
  %785 = vmatprep.subr.mxu0 0.0
  %786 = vmatpush1.msra.mxu0 %v742
  %787 = vmatprep.subr.mxu0 0.0
  %788 = vmatpush1.msra.mxu0 %v741
  %789 = vmatprep.subr.mxu0 0.0
  %790 = vmatpush1.msra.mxu0 %v740
  %791 = vmatprep.subr.mxu0 0.0
  %792 = vmatpush1.msra.mxu0 %v739
  %793 = vmatprep.subr.mxu0 0.0
  %794 = vmatpush1.msra.mxu0 %v738
  %795 = vmatprep.subr.mxu0 0.0
  %796 = vmatpush1.msra.mxu0 %v737
  %797 = vmatprep.subr.mxu0 0.0
  %798 = vmatpush1.msra.mxu0 %v736
  %799 = vmatprep.subr.mxu0 0.0
  %800 = vmatpush1.msra.mxu0 %v735
  %801 = vmatprep.subr.mxu0 0.0
  %802 = vmatpush1.msra.mxu0 %v734
  %803 = vmatprep.subr.mxu0 0.0
  %804 = vmatpush1.msra.mxu0 %v733
  %805 = vmatprep.subr.mxu0 0.0
  %806 = vmatpush1.msra.mxu0 %v732
  %807 = vmatprep.subr.mxu0 0.0
  %808 = vmatpush1.msra.mxu0 %v731
  %809 = vmatprep.subr.mxu0 0.0
  %810 = vmatpush1.msra.mxu0 %v730
  %811 = vmatprep.subr.mxu0 0.0
  %812 = vmatpush2.msra.mxu0 0.0
  %813 = vmatprep.subr.mxu0 0.0
  %814 = vmatpush2.msra.mxu0 0.0
  %815 = vmatprep.subr.mxu0 0.0
  %816 = vmatpush2.msra.mxu0 0.0
  %817 = vmatprep.subr.mxu0 0.0
  %818 = vmatpush2.msra.mxu0 0.0
  %819 = vmatprep.subr.mxu0 0.0
  %820 = vmatpush2.msra.mxu0 0.0
  %821 = vmatprep.subr.mxu0 0.0
  %822 = vmatpush2.msra.mxu0 0.0
  %823 = vmatprep.subr.mxu0 0.0
  %824 = vmatpush2.msra.mxu0 0.0
  %825 = vmatprep.subr.mxu0 0.0
  %826 = vmatpush2.msra.mxu0 0.0
  %827 = vmatprep.subr.mxu0 0.0
  %828 = vmatpush2.msra.mxu0 0.0
  %829 = vmatprep.subr.mxu0 0.0
  %830 = vmatpush2.msra.mxu0 0.0
  %831 = vmatprep.subr.mxu0 0.0
  %832 = vmatpush2.msra.mxu0 0.0
  %833 = vmatprep.subr.mxu0 0.0
  %834 = vmatpush2.msra.mxu0 0.0
  %835 = vmatprep.subr.mxu0 0.0
  %836 = vmatpush2.msra.mxu0 0.0
  %837 = vmatprep.subr.mxu0 0.0
  %838 = vmatpush2.msra.mxu0 0.0
  %839 = vmatprep.subr.mxu0 0.0
  %840 = vmatpush2.msra.mxu0 0.0
  %841 = vmatprep.subr.mxu0 0.0
  %842 = vmatpush2.msra.mxu0 0.0
  %843 = vmatprep.mubr.f32.mxu0 0.0
  %844 = vmatmul.mubr.f32.gmra.mxu0 %v777
  %v845 = vpop.f32.mrf.mxu0
  %v846 = vadd.f32 0.0, %v845
  %v847 = vpop.f32.mrf.mxu0
  %848 = vdwg.mxu0
  %v849 = vadd.f32 %v778, %v846
  %850 = vst [vmem:[%s9] sm:$0xff] %v849
  %s851 = sadd.s32 0, 0
  %s852 = smul.u32 16, %s851
  %p853 = scmp.lt.s32.totalorder %s852, 15
  %s854 = scalar_select %p853, %s852, 15
  %s855 = smul.addr %s854, 8
  %s856 = scalar_lea.vmem %s8, %s855
  // Predicated region
  $region38: #{readout_forward.1} parent=0 // pred_check
    _
  $region39: #{readout_forward.1} parent=0 // pred_check_branch
    %858 = sbr.rel (0) target = $region41
  $region40: #{readout_forward.1} parent=0 // pred_region
    %s859 = sadd.s32 0, 0
    %s860 = smul.u32 16, %s859
  $region41: #{readout_forward.1} parent=0 // pred_fallthru
    _
  // Predicated region
  $region42: #{readout_forward.1} parent=0 // pred_check
    _
  $region43: #{readout_forward.1} parent=0 // pred_check_branch
    %862 = sbr.rel (0) target = $region45
  $region44: #{readout_forward.1} parent=0 // pred_region
    _
  $region45: #{readout_forward.1} parent=0 // pred_fallthru
    _
  // Predicated region
  $region46: #{readout_forward.1} parent=0 // pred_check
    _
  $region47: #{readout_forward.1} parent=0 // pred_check_branch
    %864 = sbr.rel (0) target = $region49
  $region48: #{readout_forward.1} parent=0 // pred_region
    %s865 = sadd.s32 0, 0
    %s866 = smul.u32 16, %s865
    %p867 = scmp.lt.s32.totalorder %s866, 15
    %s868 = scalar_select %p867, %s866, 15
    %s869 = smul.addr %s868, 8
    %s870 = scalar_lea.vmem %s8, %s869
  $region49: #{readout_forward.1} parent=0 // pred_fallthru
    _
  // Predicated region
  $region50: #{readout_forward.1} parent=0 // pred_check
    _
  $region51: #{readout_forward.1} parent=0 // pred_check_branch
    %872 = sbr.rel (0) target = $region53
  $region52: #{readout_forward.1} parent=0 // pred_region
    _
  $region53: #{readout_forward.1} parent=0 // pred_fallthru
    _

</llo_original>
